<compile_context>
chip_gen: v7x
topology: tpu7x:2x2x1
jax: 0.10.0
libtpu: 0.0.40
codegen_flags: <defaults>
</compile_context>

<pallas_src>
import math

import jax
import jax.numpy as jnp
from jax.experimental import pallas as pl
from jax.experimental.pallas import tpu as pltpu

_LANE = 128     # lane width: last block dim should be a multiple of this
_SUBLANE = 8    # f32 sublane count: second-to-last block dim multiple
_VMEM_BUDGET = 40 * 1024 * 1024   # working-set target, safe under v7x's 64 MiB


def _round_up(x, m):
    return ((x + m - 1) // m) * m


def _pick_divisor_tile(total, target, align):
    """Largest multiple of `align` dividing `total`, <= max(target, align).

    `total` must be a multiple of `align`.
    """
    t = max(align, (min(target, total) // align) * align)
    while total % t != 0:
        t -= align
    return t


def _ffn_kernel(x_ref, w1_ref, b1_ref, w2_ref, b2_ref, o_ref, acc_ref):
    """One (row-tile i, hidden-chunk j) step of y = relu(x@W1 + b1) @ W2 + b2."""
    j = pl.program_id(1)

    # Seed the f32 accumulator with b2 on the first hidden chunk (free init).
    @pl.when(j == 0)
    def _init():
        acc_ref[...] = jnp.broadcast_to(b2_ref[...], acc_ref.shape)

    # First matmul: bf16 operands on the MXU, f32 accumulation.
    x = x_ref[...].astype(jnp.bfloat16)
    h = jnp.dot(x, w1_ref[...], preferred_element_type=jnp.float32)
    # Bias add + ReLU in f32 on the VPU.
    h = jnp.maximum(h + b1_ref[...], 0.0)
    # Second matmul: accumulate this hidden chunk's contribution in f32.
    acc_ref[...] += jnp.dot(h.astype(jnp.bfloat16), w2_ref[...],
                            preferred_element_type=jnp.float32)

    # Write the finished row tile out once, after the last hidden chunk.
    @pl.when(j == pl.num_programs(1) - 1)
    def _finalize():
        o_ref[...] = acc_ref[...].astype(o_ref.dtype)


def feed_forward_block(x, w1, b1, w2, b2, *, block_rows=512, block_hidden=512):
    """y = relu(x @ w1 + b1) @ w2 + b2.

    x: (..., dim); w1: (dim, hidden); b1: (hidden,); w2: (hidden, dim); b2: (dim,).
    (nn.Linear weights are stored pre-transposed to (in_features, out_features).)
    """
    orig_shape = x.shape
    dim = orig_shape[-1]
    hidden = w1.shape[1]
    b1 = b1.reshape(1, hidden).astype(jnp.float32)
    b2 = b2.reshape(1, dim).astype(jnp.float32)

    # ---- lane-dense padding of the feature dims (avoid masked vst.msk stores) ----
    dim_p = _round_up(dim, _LANE)
    hidden_p = _round_up(hidden, _LANE)
    if dim_p != dim:
        w1 = jnp.pad(w1, ((0, dim_p - dim), (0, 0)))
        w2 = jnp.pad(w2, ((0, 0), (0, dim_p - dim)))
        b2 = jnp.pad(b2, ((0, 0), (0, dim_p - dim)))
    if hidden_p != hidden:
        w1 = jnp.pad(w1, ((0, 0), (0, hidden_p - hidden)))
        b1 = jnp.pad(b1, ((0, 0), (0, hidden_p - hidden)))
        w2 = jnp.pad(w2, ((0, hidden_p - hidden), (0, 0)))

    # bf16 weights halve the dominant (weight) HBM traffic; MXU is natively bf16.
    w1 = w1.astype(jnp.bfloat16)
    w2 = w2.astype(jnp.bfloat16)

    # ---- row axis: flatten leading dims; pick a tile that divides the row count ----
    x2 = x.reshape(-1, dim)
    m = x2.shape[0]
    m_pad = _round_up(m, _SUBLANE)
    pad_rows = m_pad - m
    pad_cols = dim_p - dim
    if pad_rows or pad_cols:
        # Only copies x when dim % 128 != 0 or m % 8 != 0 (tiny shapes).
        x2 = jnp.pad(x2, ((0, pad_rows), (0, pad_cols)))

    # Hidden chunk: multiple of 128 dividing hidden_p, <= block_hidden; shrink if the
    # (double-buffered, bf16) weight chunks alone would blow the VMEM budget.
    th = _pick_divisor_tile(hidden_p, block_hidden, _LANE)
    weight_chunk_bytes = 2 * (dim_p * th + th * dim_p) * 2
    while weight_chunk_bytes > _VMEM_BUDGET // 2 and th > _LANE:
        th = _pick_divisor_tile(hidden_p, th // 2, _LANE)
        weight_chunk_bytes = 2 * (dim_p * th + th * dim_p) * 2

    # Row tile: as large as the budget allows, dividing m_pad (no pad copy), and
    # giving >= 2 grid steps so the "parallel" axis can split across v7x's 2 TCs.
    per_row_bytes = dim_p * (2 * 4 + 2 * 4 + 4) + th * 4   # x(x2), out(x2), acc, h
    max_rows = max(_SUBLANE, (_VMEM_BUDGET - weight_chunk_bytes) // per_row_bytes)
    row_target = min(block_rows, int(max_rows), max(_SUBLANE, m_pad // 2))
    tm = _pick_divisor_tile(m_pad, row_target, _SUBLANE)

    grid = (m_pad // tm, hidden_p // th)

    # Explicit scoped-VMEM limit (defaults are 16/32 MiB), with headroom, <= 64 MiB.
    vmem_bytes = (
        2 * tm * dim_p * 4          # x blocks (double-buffered, f32)
        + 2 * dim_p * th * 2        # w1 chunks (bf16)
        + 2 * th * 4                # b1 chunks
        + 2 * th * dim_p * 2        # w2 chunks (bf16)
        + 2 * dim_p * 4             # b2
        + 2 * tm * dim_p * 4        # out blocks
        + tm * dim_p * 4            # f32 accumulator scratch
        + tm * th * 4               # h intermediate headroom
    )
    vmem_limit = min(max(2 * vmem_bytes + (4 << 20), 32 << 20), 64 << 20)

    out = pl.pallas_call(
        _ffn_kernel,
        out_shape=jax.ShapeDtypeStruct((m_pad, dim_p), jnp.float32),
        grid_spec=pltpu.PrefetchScalarGridSpec(
            num_scalar_prefetch=0,
            grid=grid,
            in_specs=[
                pl.BlockSpec((tm, dim_p), lambda i, j: (i, 0)),    # x rows (no re-DMA over j)
                pl.BlockSpec((dim_p, th), lambda i, j: (0, j)),    # W1 hidden chunk
                pl.BlockSpec((1, th), lambda i, j: (0, j)),        # b1 hidden chunk
                pl.BlockSpec((th, dim_p), lambda i, j: (j, 0)),    # W2 hidden chunk
                pl.BlockSpec((1, dim_p), lambda i, j: (0, 0)),     # b2 (constant)
            ],
            out_specs=pl.BlockSpec((tm, dim_p), lambda i, j: (i, 0)),
            scratch_shapes=[pltpu.VMEM((tm, dim_p), jnp.float32)],
        ),
        compiler_params=pltpu.CompilerParams(
            dimension_semantics=("parallel", "arbitrary"),
            vmem_limit_bytes=int(vmem_limit),
        ),
    )(x2, w1, b1, w2, b2)

    if pad_rows or pad_cols:
        out = out[:m, :dim]
    return out.reshape(orig_shape[:-1] + (dim,))


def _reference(x, w1, b1, w2, b2):
    h = jnp.maximum(x @ w1 + b1, 0.0)
    return h @ w2 + b2


if __name__ == "__main__":
    B, T, dim = 2, 8, 32
    hidden = dim * 4
    key = jax.random.PRNGKey(0)
    kx, kw1, kb1, kw2, kb2 = jax.random.split(key, 5)

    x = jax.random.normal(kx, (B, T, dim), dtype=jnp.float32)

    # nn.Linear params, weights stored pre-transposed to (d_in, d_out).
    bound1 = 1.0 / math.sqrt(dim)
    w1 = jax.random.uniform(kw1, (dim, hidden), jnp.float32, -bound1, bound1)
    b1 = jax.random.uniform(kb1, (hidden,), jnp.float32, -bound1, bound1)
    bound2 = 1.0 / math.sqrt(hidden)
    w2 = jax.random.uniform(kw2, (hidden, dim), jnp.float32, -bound2, bound2)
    b2 = jax.random.uniform(kb2, (dim,), jnp.float32, -bound2, bound2)

    out = feed_forward_block(x, w1, b1, w2, b2)
    out = jax.block_until_ready(out)

    ref = _reference(x, w1, b1, w2, b2)
    assert out.shape == (B, T, dim)
    # bf16 matmul operands (f32 accumulation) -> relaxed tolerance vs f32 reference.
    max_err = float(jnp.max(jnp.abs(out - ref)))
    assert jnp.allclose(out, ref, atol=5e-2, rtol=5e-2), f"mismatch vs reference: max abs err {max_err}"

    print("KERNEL_OK")
</pallas_src>

<mosaic_0001>
module attributes {stable_mosaic.version = 11 : i64} {
  func.func @_ffn_kernel(%arg0: i32, %arg1: i32, %arg2: memref<8x128xf32, #tpu.memory_space<vmem>>, %arg3: memref<128x128xbf16, #tpu.memory_space<vmem>>, %arg4: memref<1x128xf32, #tpu.memory_space<vmem>>, %arg5: memref<128x128xbf16, #tpu.memory_space<vmem>>, %arg6: memref<1x128xf32, #tpu.memory_space<vmem>>, %arg7: memref<8x128xf32, #tpu.memory_space<vmem>>, %arg8: memref<8x128xf32, #tpu.memory_space<vmem>>) attributes {dimension_semantics = [#tpu.dimension_semantics<parallel>, #tpu.dimension_semantics<arbitrary>], iteration_bounds = array<i64: 2, 1>, scalar_prefetch = 0 : i64, scratch_operands = 1 : i64, tpu.core_type = #tpu.core_type<tc>, window_params = [{transform_indices = @transform_0, window_bounds = array<i64: 8, 128>}, {transform_indices = @transform_1, window_bounds = array<i64: 128, 128>}, {transform_indices = @transform_2, window_bounds = array<i64: 1, 128>}, {transform_indices = @transform_3, window_bounds = array<i64: 128, 128>}, {pipeline_mode = #tpu.pipeline_mode<synchronous>, transform_indices = @transform_4, window_bounds = array<i64: 1, 128>}, {transform_indices = @transform_5, window_bounds = array<i64: 8, 128>}]} {
    %c0_i32 = arith.constant 0 : i32
    %0 = arith.cmpi eq, %arg1, %c0_i32 : i32
    %1 = arith.extui %0 : i1 to i32
    %c0_i32_0 = arith.constant 0 : i32
    %2 = arith.cmpi ne, %1, %c0_i32_0 : i32
    scf.if %2 {
      %c0_16 = arith.constant 0 : index
      %c0_17 = arith.constant 0 : index
      %21 = vector.load %arg6[%c0_16, %c0_17] : memref<1x128xf32, #tpu.memory_space<vmem>>, vector<1x128xf32>
      %22 = vector.shape_cast %21 : vector<1x128xf32> to vector<1x128xf32>
      %23 = vector.broadcast %22 : vector<1x128xf32> to vector<8x128xf32>
      %c0_18 = arith.constant 0 : index
      %c0_19 = arith.constant 0 : index
      %24 = vector.load %arg8[%c0_18, %c0_19] : memref<8x128xf32, #tpu.memory_space<vmem>>, vector<8x128xf32>
      tpu.vector_store %arg8[%c0_18, %c0_19], %23 {strides = array<i32>} : memref<8x128xf32, #tpu.memory_space<vmem>>, vector<8x128xf32>,
    } else {
    }
    %c0 = arith.constant 0 : index
    %c0_1 = arith.constant 0 : index
    %3 = vector.load %arg2[%c0, %c0_1] : memref<8x128xf32, #tpu.memory_space<vmem>>, vector<8x128xf32>
    %4 = arith.truncf %3 : vector<8x128xf32> to vector<8x128xbf16>
    %c0_2 = arith.constant 0 : index
    %c0_3 = arith.constant 0 : index
    %5 = vector.load %arg3[%c0_2, %c0_3] : memref<128x128xbf16, #tpu.memory_space<vmem>>, vector<128x128xbf16>
    %cst = arith.constant dense<0.000000e+00> : vector<8x128xf32>
    %6 = tpu.matmul %4, %5, %cst {dimension_numbers = #tpu.dot_dimension_numbers<[1], [0], [0], [1], [0, 0, 1, 1], [], []>} : vector<8x128xbf16>, vector<128x128xbf16>, vector<8x128xf32> -> vector<8x128xf32>
    %c0_4 = arith.constant 0 : index
    %c0_5 = arith.constant 0 : index
    %7 = vector.load %arg4[%c0_4, %c0_5] : memref<1x128xf32, #tpu.memory_space<vmem>>, vector<1x128xf32>
    %8 = vector.broadcast %7 : vector<1x128xf32> to vector<8x128xf32>
    %9 = arith.addf %6, %8 : vector<8x128xf32>
    %cst_6 = arith.constant 0.000000e+00 : f32
    %10 = vector.broadcast %cst_6 : f32 to vector<8x128xf32>
    %11 = arith.maximumf %9, %10 : vector<8x128xf32>
    %c0_7 = arith.constant 0 : index
    %c0_8 = arith.constant 0 : index
    %12 = vector.load %arg8[%c0_7, %c0_8] : memref<8x128xf32, #tpu.memory_space<vmem>>, vector<8x128xf32>
    %13 = arith.truncf %11 : vector<8x128xf32> to vector<8x128xbf16>
    %c0_9 = arith.constant 0 : index
    %c0_10 = arith.constant 0 : index
    %14 = vector.load %arg5[%c0_9, %c0_10] : memref<128x128xbf16, #tpu.memory_space<vmem>>, vector<128x128xbf16>
    %cst_11 = arith.constant dense<0.000000e+00> : vector<8x128xf32>
    %15 = tpu.matmul %13, %14, %cst_11 {dimension_numbers = #tpu.dot_dimension_numbers<[1], [0], [0], [1], [0, 0, 1, 1], [], []>} : vector<8x128xbf16>, vector<128x128xbf16>, vector<8x128xf32> -> vector<8x128xf32>
    %16 = arith.addf %12, %15 : vector<8x128xf32>
    %c0_12 = arith.constant 0 : index
    %c0_13 = arith.constant 0 : index
    %17 = vector.load %arg8[%c0_12, %c0_13] : memref<8x128xf32, #tpu.memory_space<vmem>>, vector<8x128xf32>
    tpu.vector_store %arg8[%c0_12, %c0_13], %16 {strides = array<i32>} : memref<8x128xf32, #tpu.memory_space<vmem>>, vector<8x128xf32>,
    %c0_i32_14 = arith.constant 0 : i32
    %18 = arith.cmpi eq, %arg1, %c0_i32_14 : i32
    %19 = arith.extui %18 : i1 to i32
    %c0_i32_15 = arith.constant 0 : i32
    %20 = arith.cmpi ne, %19, %c0_i32_15 : i32
    scf.if %20 {
      %c0_16 = arith.constant 0 : index
      %c0_17 = arith.constant 0 : index
      %21 = vector.load %arg8[%c0_16, %c0_17] : memref<8x128xf32, #tpu.memory_space<vmem>>, vector<8x128xf32>
      %c0_18 = arith.constant 0 : index
      %c0_19 = arith.constant 0 : index
      %22 = vector.load %arg7[%c0_18, %c0_19] : memref<8x128xf32, #tpu.memory_space<vmem>>, vector<8x128xf32>
      tpu.vector_store %arg7[%c0_18, %c0_19], %21 {strides = array<i32>} : memref<8x128xf32, #tpu.memory_space<vmem>>, vector<8x128xf32>,
    } else {
    }
    return
  }
  func.func @transform_0(%arg0: i32, %arg1: i32) -> (i32, i32) {
    %c0_i32 = arith.constant 0 : i32
    %c0_i32_0 = arith.constant 0 : i32
    return %arg0, %c0_i32 : i32, i32
  }
  func.func @transform_1(%arg0: i32, %arg1: i32) -> (i32, i32) {
    %c0_i32 = arith.constant 0 : i32
    %c0_i32_0 = arith.constant 0 : i32
    return %c0_i32, %arg1 : i32, i32
  }
  func.func @transform_2(%arg0: i32, %arg1: i32) -> (i32, i32) {
    %c0_i32 = arith.constant 0 : i32
    %c0_i32_0 = arith.constant 0 : i32
    return %c0_i32, %arg1 : i32, i32
  }
  func.func @transform_3(%arg0: i32, %arg1: i32) -> (i32, i32) {
    %c0_i32 = arith.constant 0 : i32
    %c0_i32_0 = arith.constant 0 : i32
    return %arg1, %c0_i32 : i32, i32
  }
  func.func @transform_4(%arg0: i32, %arg1: i32) -> (i32, i32) {
    %c0_i32 = arith.constant 0 : i32
    %c0_i32_0 = arith.constant 0 : i32
    %c0_i32_1 = arith.constant 0 : i32
    return %c0_i32, %c0_i32_0 : i32, i32
  }
  func.func @transform_5(%arg0: i32, %arg1: i32) -> (i32, i32) {
    %c0_i32 = arith.constant 0 : i32
    %c0_i32_0 = arith.constant 0 : i32
    return %arg0, %c0_i32 : i32, i32
  }
}

</mosaic_0001>

<llo_original>
// kernel: tpu_custom_call.1
$region0: #{tpu_custom_call.1}
  #allocation0 [shape = 'u32[]', space=smem, size = 0x4, offset = 0x4, fixed_abs, tag = 'smem constant byte address 0x4 - core index']
  #allocation1 [shape = 'u32[144,128]{1,0:T(1,128)}', space=vmem, size = 0x12000, scoped, tag = 'internal scratch']
  #allocation2 [shape = 'f32[8,128]{1,0:T(8,128)}', space=vmem, size = 0x1000, scoped, tag = 'scratch operand']
  %s0 = inlined_call_operand.hbm [shape: f32[16,128], index: 0, kind: input, shape index: {}]
  %s1 = inlined_call_operand.hbm [shape: bf16[128,128], index: 1, kind: input, shape index: {}]
  %s2 = inlined_call_operand.vmem [shape: f32[1,128], index: 2, kind: input, shape index: {}]
  %s3 = inlined_call_operand.hbm [shape: bf16[128,128], index: 3, kind: input, shape index: {}]
  %s4 = inlined_call_operand.vmem [shape: f32[1,128], index: 4, kind: input, shape index: {}]
  %s5 = inlined_call_operand.hbm [shape: f32[16,128], index: 5, kind: output, shape index: {}]
  %s6 = sld [smem:[#allocation0]]
  $region73: #{tpu_custom_call.1} parent=0
    _
  %s8 = ssub.s32 1, %s6
  %s9 = scalar_select 0, %s8, %s6
  $region1: #{tpu_custom_call.1} parent=0
    #allocation3 [shape = 'u8[8192]{0}', space=vmem, size = 0x2000, scoped, tag = 'input window, operand 0']
    #allocation4 [shape = 's32[2]{0}', space=sflag, size = 0x8, scoped, tag = 'scoped memory for tpu_custom_call.1']
    #allocation5 [shape = 's32[2]{0}', space=sflag, size = 0x8, scoped, tag = 'scoped memory for tpu_custom_call.1']
    #allocation6 [shape = 'u8[32768]{0}', space=vmem, size = 0x8000, scoped, tag = 'input window, operand 1, single buffered']
    #allocation7 [shape = 's32[1]{0}', space=sflag, size = 0x4, scoped, tag = 'scoped memory for tpu_custom_call.1']
    #allocation8 [shape = 'u8[32768]{0}', space=vmem, size = 0x8000, scoped, tag = 'input window, operand 3, single buffered']
    #allocation9 [shape = 'u8[8192]{0}', space=vmem, size = 0x2000, scoped, tag = 'output window, operand 0']
    %10 = vsyncpa [#allocation4], 0
    %s11 = scalar_lea.sflag [#allocation4], 1
    %12 = vsyncpa %s11, 0
    %13 = vsyncpa [#allocation7], 0
    %14 = vsyncpa [#allocation5], 0
    %s15 = scalar_lea.sflag [#allocation5], 1
    %16 = vsyncpa %s15, 0
    loop: start=0, step=1, limit=4
    $region2: #{tpu_custom_call.1} parent=1 // loop_pre_header
      _
    $region3: #{tpu_custom_call.1} parent=1 // loop_header
      %s18 = sphi 0, %s22
      %p19 = scmp.ge.s32.totalorder %s18, 4
      %s25 = sphi 0, %s37
      %s26 = sphi 0, %s33
      %s27 = sphi 0, %s25
      %s28 = sphi 0, %s26
      %s29 = sphi 0, %s27
      %s30 = sphi 0, %s28
      %s40 = sphi 0, %s42
      %s43 = sphi 0, %s40
      %s44 = sphi 0, %s43
      %s60 = sphi 0, %s44
      %s66 = sphi 0, %s68
      %s69 = sphi 0, %s66
      %s70 = sphi 0, %s69
      %s86 = sphi 0, %s70
      %s92 = sphi 0, %s94
      %s95 = sphi 0, %s92
      %s96 = sphi 0, %s95
      %s112 = sphi 0, %s96
      %s118 = sphi 0, %s120
      %s121 = sphi 0, %s118
      %s122 = sphi 0, %s121
      %s138 = sphi 0, %s122
      %s142 = sphi 0, %s142
      %s144 = sphi 0, %s142
      %s145 = sphi 0, %s144
      %s159 = sphi 0, %s145
      %s165 = sphi 0, %s167
      %s168 = sphi 0, %s165
      %s169 = sphi 0, %s168
      %s185 = sphi 0, %s169
    $region4: #{tpu_custom_call.1} parent=1 // loop_header_branch
      %21 = sbr.rel (%p19) target = $region8
    $region5: #{tpu_custom_call.1} parent=1 // loop_body
      %s23 = ssub.s32 %s18, 1
      %s24 = ssub.s32 %s18, 2
      %s31 = sadd.s32 1, %s26
      %p32 = scmp.ge.s32.totalorder %s31, 1
      %s33 = scalar_select %p32, 0, %s31
      %s34 = sadd.s32 1, %s25
      %s35 = scalar_select %p32, %s34, %s25
      %p36 = scmp.ge.s32.totalorder %s35, 2
      %s37 = scalar_select %p36, 0, %s35
      %s38 = ssub.s32 %s25, %s37
      %p39 = scmp.eq.s32.totalorder %s38, 0
      %s41 = sadd.s32 %s40, 1
      %s42 = scalar_select %p39, %s40, %s41
      %p45 = pneg %p39
      %p46 = scmp.eq.s32.totalorder %s18, 1
      %p47 = por %p45, %p46
      %p48 = scmp.ne.s32.totalorder %s40, %s43
      %p49 = scmp.eq.s32.totalorder %s18, 0
      %p50 = por %p48, %p49
      %p51 = scmp.ne.s32.totalorder %s40, %s43
      %p52 = scmp.eq.s32.totalorder %s23, 1
      %p53 = por %p51, %p52
      %p54 = scmp.ne.s32.totalorder %s43, %s44
      %p55 = scmp.eq.s32.totalorder %s23, 0
      %p56 = por %p54, %p55
      %p57 = scmp.ne.s32.totalorder %s43, %s44
      %p58 = scmp.eq.s32.totalorder %s24, 1
      %p59 = por %p57, %p58
      %p61 = scmp.ne.s32.totalorder %s44, %s60
      %p62 = scmp.eq.s32.totalorder %s24, 0
      %p63 = por %p61, %p62
      %s64 = ssub.s32 %s26, %s33
      %p65 = scmp.eq.s32.totalorder %s64, 0
      %s67 = sadd.s32 %s66, 1
      %s68 = scalar_select %p65, %s66, %s67
      %p71 = pneg %p65
      %p72 = scmp.eq.s32.totalorder %s18, 1
      %p73 = por %p71, %p72
      %p74 = scmp.ne.s32.totalorder %s66, %s69
      %p75 = scmp.eq.s32.totalorder %s18, 0
      %p76 = por %p74, %p75
      %p77 = scmp.ne.s32.totalorder %s66, %s69
      %p78 = scmp.eq.s32.totalorder %s23, 1
      %p79 = por %p77, %p78
      %p80 = scmp.ne.s32.totalorder %s69, %s70
      %p81 = scmp.eq.s32.totalorder %s23, 0
      %p82 = por %p80, %p81
      %p83 = scmp.ne.s32.totalorder %s69, %s70
      %p84 = scmp.eq.s32.totalorder %s24, 1
      %p85 = por %p83, %p84
      %p87 = scmp.ne.s32.totalorder %s70, %s86
      %p88 = scmp.eq.s32.totalorder %s24, 0
      %p89 = por %p87, %p88
      %s90 = ssub.s32 %s26, %s33
      %p91 = scmp.eq.s32.totalorder %s90, 0
      %s93 = sadd.s32 %s92, 1
      %s94 = scalar_select %p91, %s92, %s93
      %p97 = pneg %p91
      %p98 = scmp.eq.s32.totalorder %s18, 1
      %p99 = por %p97, %p98
      %p100 = scmp.ne.s32.totalorder %s92, %s95
      %p101 = scmp.eq.s32.totalorder %s18, 0
      %p102 = por %p100, %p101
      %p103 = scmp.ne.s32.totalorder %s92, %s95
      %p104 = scmp.eq.s32.totalorder %s23, 1
      %p105 = por %p103, %p104
      %p106 = scmp.ne.s32.totalorder %s95, %s96
      %p107 = scmp.eq.s32.totalorder %s23, 0
      %p108 = por %p106, %p107
      %p109 = scmp.ne.s32.totalorder %s95, %s96
      %p110 = scmp.eq.s32.totalorder %s24, 1
      %p111 = por %p109, %p110
      %p113 = scmp.ne.s32.totalorder %s96, %s112
      %p114 = scmp.eq.s32.totalorder %s24, 0
      %p115 = por %p113, %p114
      %s116 = ssub.s32 %s26, %s33
      %p117 = scmp.eq.s32.totalorder %s116, 0
      %s119 = sadd.s32 %s118, 1
      %s120 = scalar_select %p117, %s118, %s119
      %p123 = pneg %p117
      %p124 = scmp.eq.s32.totalorder %s18, 1
      %p125 = por %p123, %p124
      %p126 = scmp.ne.s32.totalorder %s118, %s121
      %p127 = scmp.eq.s32.totalorder %s18, 0
      %p128 = por %p126, %p127
      %p129 = scmp.ne.s32.totalorder %s118, %s121
      %p130 = scmp.eq.s32.totalorder %s23, 1
      %p131 = por %p129, %p130
      %p132 = scmp.ne.s32.totalorder %s121, %s122
      %p133 = scmp.eq.s32.totalorder %s23, 0
      %p134 = por %p132, %p133
      %p135 = scmp.ne.s32.totalorder %s121, %s122
      %p136 = scmp.eq.s32.totalorder %s24, 1
      %p137 = por %p135, %p136
      %p139 = scmp.ne.s32.totalorder %s122, %s138
      %p140 = scmp.eq.s32.totalorder %s24, 0
      %p141 = por %p139, %p140
      %s143 = sadd.s32 %s142, 1
      %p146 = scmp.eq.s32.totalorder %s18, 1
      %p147 = scmp.ne.s32.totalorder %s142, %s144
      %p148 = scmp.eq.s32.totalorder %s18, 0
      %p149 = por %p147, %p148
      %p150 = scmp.ne.s32.totalorder %s142, %s144
      %p151 = scmp.eq.s32.totalorder %s23, 1
      %p152 = por %p150, %p151
      %p153 = scmp.ne.s32.totalorder %s144, %s145
      %p154 = scmp.eq.s32.totalorder %s23, 0
      %p155 = por %p153, %p154
      %p156 = scmp.ne.s32.totalorder %s144, %s145
      %p157 = scmp.eq.s32.totalorder %s24, 1
      %p158 = por %p156, %p157
      %p160 = scmp.ne.s32.totalorder %s145, %s159
      %p161 = scmp.eq.s32.totalorder %s24, 0
      %p162 = por %p160, %p161
      %s163 = ssub.s32 %s25, %s37
      %p164 = scmp.eq.s32.totalorder %s163, 0
      %s166 = sadd.s32 %s165, 1
      %s167 = scalar_select %p164, %s165, %s166
      %p170 = pneg %p164
      %p171 = scmp.eq.s32.totalorder %s18, 1
      %p172 = por %p170, %p171
      %p173 = scmp.ne.s32.totalorder %s165, %s168
      %p174 = scmp.eq.s32.totalorder %s18, 0
      %p175 = por %p173, %p174
      %p176 = scmp.ne.s32.totalorder %s165, %s168
      %p177 = scmp.eq.s32.totalorder %s23, 1
      %p178 = por %p176, %p177
      %p179 = scmp.ne.s32.totalorder %s168, %s169
      %p180 = scmp.eq.s32.totalorder %s23, 0
      %p181 = por %p179, %p180
      %p182 = scmp.ne.s32.totalorder %s168, %s169
      %p183 = scmp.eq.s32.totalorder %s24, 1
      %p184 = por %p182, %p183
      %p186 = scmp.ne.s32.totalorder %s169, %s185
      %p187 = scmp.eq.s32.totalorder %s24, 0
      %p188 = por %p186, %p187
      %p189 = scmp.le.s32.totalorder 1, %s18
      %p190 = scmp.lt.s32.totalorder %s18, 3
      %p191 = pnand %p189, %p190
      %p192 = pneg %p191
      // Predicated region
      $region9: #{tpu_custom_call.1} parent=5 // pred_check
        _
      $region10: #{tpu_custom_call.1} parent=5 // pred_check_branch
        %194 = sbr.rel (%p191) target = $region12
      $region11: #{tpu_custom_call.1} parent=5 // pred_region
        %s195 = ssub.s32 %s18, 1
        // Predicated region
        $region13: #{tpu_custom_call.1} parent=11 // pred_check
          %p196 = pneg %p82
        $region14: #{tpu_custom_call.1} parent=11 // pred_check_branch
          %198 = sbr.rel (%p196) target = $region16
        $region15: #{tpu_custom_call.1} parent=11 // pred_region
          %s200 = ssub.s32 1024, 1024
          %201 = vsyncadd [#allocation7], %s200
          %s202 = smul.addr %s28, 64
          %s203 = scalar_lea.hbm %s1, %s202
          %s204 = sshll.u32 [#allocation6], 4
          %s205 = int_to_ptr.vmem [resolvable:$true] %s204
          %210 = dma.hbm_to_vmem [thread:$0]  %s203, 1024, %s205, [#allocation7], 64, 64, 4
        $region16: #{tpu_custom_call.1} parent=11 // pred_fallthru
          _
        // Predicated region
        $region17: #{tpu_custom_call.1} parent=11 // pred_check
          %p211 = pneg %p108
        $region18: #{tpu_custom_call.1} parent=11 // pred_check_branch
          %213 = sbr.rel (%p211) target = $region20
        $region19: #{tpu_custom_call.1} parent=11 // pred_region
          %p214 = scmp.lt.s32.totalorder %s28, 0
          %s215 = scalar_select %p214, %s28, 0
          %s216 = scalar_lea.vmem %s2, %s215
        $region20: #{tpu_custom_call.1} parent=11 // pred_fallthru
          _
        // Predicated region
        $region21: #{tpu_custom_call.1} parent=11 // pred_check
          %p217 = pneg %p134
        $region22: #{tpu_custom_call.1} parent=11 // pred_check_branch
          %219 = sbr.rel (%p217) target = $region24
        $region23: #{tpu_custom_call.1} parent=11 // pred_region
          %s220 = smul.u32 16, %s28
          %s222 = ssub.s32 1024, 1024
          %223 = vsyncadd [#allocation7], %s222
          %s224 = smul.addr %s220, 64
          %s225 = scalar_lea.hbm %s3, %s224
          %s226 = sshll.u32 [#allocation8], 4
          %s227 = int_to_ptr.vmem [resolvable:$true] %s226
          %232 = dma.hbm_to_vmem [thread:$0]  %s225, 1024, %s227, [#allocation7], 64, 64, 4
        $region24: #{tpu_custom_call.1} parent=11 // pred_fallthru
          _
        // Predicated region
        $region25: #{tpu_custom_call.1} parent=11 // pred_check
          %p233 = pneg %p155
        $region26: #{tpu_custom_call.1} parent=11 // pred_check_branch
          %235 = sbr.rel (%p233) target = $region28
        $region27: #{tpu_custom_call.1} parent=11 // pred_region
          _
        $region28: #{tpu_custom_call.1} parent=11 // pred_fallthru
          _
      $region12: #{tpu_custom_call.1} parent=5 // pred_fallthru
        _
      %p236 = scmp.lt.s32.totalorder %s18, 2
      // Predicated region
      $region29: #{tpu_custom_call.1} parent=5 // pred_check
        %p237 = pneg %p236
      $region30: #{tpu_custom_call.1} parent=5 // pred_check_branch
        %239 = sbr.rel (%p237) target = $region32
      $region31: #{tpu_custom_call.1} parent=5 // pred_region
        // Predicated region
        $region33: #{tpu_custom_call.1} parent=31 // pred_check
          %p240 = pneg %p50
        $region34: #{tpu_custom_call.1} parent=31 // pred_check_branch
          %242 = sbr.rel (%p240) target = $region36
        $region35: #{tpu_custom_call.1} parent=31 // pred_region
          %s243 = sand.u32 %s40, 1
          %s244 = scalar_lea.sflag [#allocation4], %s243
          %s245 = sand.u32 %s40, 1
          %s246 = smul.addr %s245, 8
          %s247 = scalar_lea.vmem [#allocation3], %s246
          %s249 = ssub.s32 128, 128
          %250 = vsyncadd %s244, %s249
          %s251 = smul.addr %s25, 128
          %s252 = scalar_lea.hbm %s0, %s251
          %s254 = sshll.u32 %s247, 4
          %s255 = int_to_ptr.vmem [resolvable:$true] %s254
          %257 = dma.hbm_to_vmem [thread:$0]  %s252, 128, %s255, %s244
        $region36: #{tpu_custom_call.1} parent=31 // pred_fallthru
          _
      $region32: #{tpu_custom_call.1} parent=5 // pred_fallthru
        _
      %p258 = scmp.le.s32.totalorder 1, %s18
      %p259 = scmp.lt.s32.totalorder %s18, 3
      %p260 = pnand %p258, %p259
      %p261 = pneg %p260
      // Predicated region
      $region37: #{tpu_custom_call.1} parent=5 // pred_check
        _
      $region38: #{tpu_custom_call.1} parent=5 // pred_check_branch
        %263 = sbr.rel (%p260) target = $region40
      $region39: #{tpu_custom_call.1} parent=5 // pred_region
        %s264 = ssub.s32 %s18, 1
        %s265 = sand.u32 %s43, 1
        %s266 = scalar_lea.sflag [#allocation4], %s265
        %s267 = sand.u32 %s43, 1
        %s268 = smul.addr %s267, 8
        %s269 = scalar_lea.vmem [#allocation3], %s268
        // Predicated region
        $region41: #{tpu_custom_call.1} parent=39 // pred_check
          %p270 = pneg %p56
        $region42: #{tpu_custom_call.1} parent=39 // pred_check_branch
          %272 = sbr.rel (%p270) target = $region44
        $region43: #{tpu_custom_call.1} parent=39 // pred_region
          %273 = dma.done %s266, 128
        $region44: #{tpu_custom_call.1} parent=39 // pred_fallthru
          _
        // Predicated region
        $region45: #{tpu_custom_call.1} parent=39 // pred_check
          %p274 = pneg %p82
        $region46: #{tpu_custom_call.1} parent=39 // pred_check_branch
          %276 = sbr.rel (%p274) target = $region48
        $region47: #{tpu_custom_call.1} parent=39 // pred_region
          %277 = dma.done [#allocation7], 1024
        $region48: #{tpu_custom_call.1} parent=39 // pred_fallthru
          _
        // Predicated region
        $region49: #{tpu_custom_call.1} parent=39 // pred_check
          %p278 = pneg %p134
        $region50: #{tpu_custom_call.1} parent=39 // pred_check_branch
          %280 = sbr.rel (%p278) target = $region52
        $region51: #{tpu_custom_call.1} parent=39 // pred_region
          %281 = dma.done [#allocation7], 1024
        $region52: #{tpu_custom_call.1} parent=39 // pred_fallthru
          _
        %s282 = sand.u32 %s43, 1
        %s283 = scalar_lea.sflag [#allocation4], %s282
        %s284 = sand.u32 %s43, 1
        %s285 = smul.addr %s284, 8
        %s286 = scalar_lea.vmem [#allocation3], %s285
        %p287 = pneg %p56
        %p288 = pneg %p53
        %p289 = pneg %p82
        %p290 = pneg %p79
        %p291 = scmp.lt.s32.totalorder %s28, 0
        %s292 = scalar_select %p291, %s28, 0
        %s293 = scalar_lea.vmem %s2, %s292
        %p294 = pneg %p108
        %p295 = pneg %p105
        %p296 = pneg %p134
        %p297 = pneg %p131
        %p298 = pneg %p155
        %p299 = pneg %p152
        %p300 = pneg %p181
        %p301 = pneg %p178
        %s302 = sand.u32 %s168, 1
        %s303 = scalar_lea.sflag [#allocation5], %s302
        %s304 = sand.u32 %s168, 1
        %s305 = smul.addr %s304, 8
        %s306 = scalar_lea.vmem [#allocation9], %s305
        %p307 = scmp.lt.s32.totalorder %s28, 0
        %s308 = scalar_select %p307, %s28, 0
        %s309 = scalar_lea.vmem %s2, %s308
        %s310 = smul.u32 16, %s28
        %p312 = scmp.eq.s32.totalorder %s28, 0
        // Predicated region
        $region53: #{tpu_custom_call.1} parent=39 // pred_check
          %p313 = pneg %p312
        $region54: #{tpu_custom_call.1} parent=39 // pred_check_branch
          %315 = sbr.rel (%p313) target = $region56
        $region55: #{tpu_custom_call.1} parent=39 // pred_region
          %v316 = vld [vmem:[%s4] sm:$0x1]
          %v318 = vlaneseq
          %v319 = vshrl.u32 %v318, 7
          %v320 = vsub.s32 0, %v319
          %v321 = vrot.slane %v316, %v320
          %323 = vst [vmem:[#allocation2] sm:$0xff] %v321
        $region56: #{tpu_custom_call.1} parent=39 // pred_fallthru
          _
        %v324 = vld [vmem:[%s269] sm:$0xff]
        %v325 = vpack.c.bf16 %v324, %v324
        %v326 = vld [vmem:[#allocation6] sm:$0xf]
        %v327 = vld [vmem:[#allocation6 + $0x4] sm:$0xf]
        %v328 = vld [vmem:[#allocation6 + $0x8] sm:$0xf]
        %v329 = vld [vmem:[#allocation6 + $0xc] sm:$0xf]
        %v330 = vld [vmem:[#allocation6 + $0x10] sm:$0xf]
        %v331 = vld [vmem:[#allocation6 + $0x14] sm:$0xf]
        %v332 = vld [vmem:[#allocation6 + $0x18] sm:$0xf]
        %v333 = vld [vmem:[#allocation6 + $0x1c] sm:$0xf]
        %v334 = vld [vmem:[#allocation6 + $0x20] sm:$0xf]
        %v335 = vld [vmem:[#allocation6 + $0x24] sm:$0xf]
        %v336 = vld [vmem:[#allocation6 + $0x28] sm:$0xf]
        %v337 = vld [vmem:[#allocation6 + $0x2c] sm:$0xf]
        %v338 = vld [vmem:[#allocation6 + $0x30] sm:$0xf]
        %v339 = vld [vmem:[#allocation6 + $0x34] sm:$0xf]
        %v340 = vld [vmem:[#allocation6 + $0x38] sm:$0xf]
        %v341 = vld [vmem:[#allocation6 + $0x3c] sm:$0xf]
        %v342 = vld [vmem:[%s309] sm:$0x1]
        %v344 = vlaneseq
        %v345 = vshrl.u32 %v344, 7
        %v346 = vsub.s32 0, %v345
        %v347 = vrot.slane %v342, %v346
        %v365 = vunpack.c.l.b16 %v326
        %v366 = vunpack.c.l.b16 %v327
        %v367 = vunpack.c.l.b16 %v328
        %v368 = vunpack.c.l.b16 %v329
        %v369 = vunpack.c.l.b16 %v330
        %v370 = vunpack.c.l.b16 %v331
        %v371 = vunpack.c.l.b16 %v332
        %v372 = vunpack.c.l.b16 %v333
        %v373 = vunpack.c.l.b16 %v334
        %v374 = vunpack.c.l.b16 %v335
        %v375 = vunpack.c.l.b16 %v336
        %v376 = vunpack.c.l.b16 %v337
        %v377 = vunpack.c.l.b16 %v338
        %v378 = vunpack.c.l.b16 %v339
        %v379 = vunpack.c.l.b16 %v340
        %v380 = vunpack.c.l.b16 %v341
        %v381 = vpack.c.b16 %v366, %v365
        %v382 = vpack.c.b16 %v368, %v367
        %v383 = vpack.c.b16 %v370, %v369
        %v384 = vpack.c.b16 %v372, %v371
        %v385 = vpack.c.b16 %v374, %v373
        %v386 = vpack.c.b16 %v376, %v375
        %v387 = vpack.c.b16 %v378, %v377
        %v388 = vpack.c.b16 %v380, %v379
        %397 = vmatprep.subr.bf16.mxu0 0
        %398 = vmatpush1.bf16.msra.mxu0 %v381
        %399 = vmatprep.subr.bf16.mxu0 0
        %400 = vmatpush1.bf16.msra.mxu0 %v382
        %401 = vmatprep.subr.bf16.mxu0 0
        %402 = vmatpush1.bf16.msra.mxu0 %v383
        %403 = vmatprep.subr.bf16.mxu0 0
        %404 = vmatpush1.bf16.msra.mxu0 %v384
        %405 = vmatprep.subr.bf16.mxu0 0
        %406 = vmatpush1.bf16.msra.mxu0 %v385
        %407 = vmatprep.subr.bf16.mxu0 0
        %408 = vmatpush1.bf16.msra.mxu0 %v386
        %409 = vmatprep.subr.bf16.mxu0 0
        %410 = vmatpush1.bf16.msra.mxu0 %v387
        %411 = vmatprep.subr.bf16.mxu0 0
        %412 = vmatpush1.bf16.msra.mxu0 %v388
        %413 = vmatprep.subr.bf16.mxu0 0
        %414 = vmatpush1.bf16.msra.mxu0 0
        %415 = vmatprep.subr.bf16.mxu0 0
        %416 = vmatpush1.bf16.msra.mxu0 0
        %417 = vmatprep.subr.bf16.mxu0 0
        %418 = vmatpush1.bf16.msra.mxu0 0
        %419 = vmatprep.subr.bf16.mxu0 0
        %420 = vmatpush1.bf16.msra.mxu0 0
        %421 = vmatprep.subr.bf16.mxu0 0
        %422 = vmatpush1.bf16.msra.mxu0 0
        %423 = vmatprep.subr.bf16.mxu0 0
        %424 = vmatpush1.bf16.msra.mxu0 0
        %425 = vmatprep.subr.bf16.mxu0 0
        %426 = vmatpush1.bf16.msra.mxu0 0
        %427 = vmatprep.subr.bf16.mxu0 0
        %428 = vmatpush1.bf16.msra.mxu0 0
        %429 = vmatprep.mubr.bf16.mxu0 0
        %430 = vmatmul.mubr.bf16.gmra.mrb[0].mxu0 %v325
        %v431 = vpop.f32.mrb[0].mxu0
        %v432 = vadd.f32 %v347, %v431
        %v433 = vpop.f32.mrb[0].mxu0
        %v434 = vpop.f32.mrb[0].mxu0
        %v435 = vpop.f32.mrb[0].mxu0
        %436 = vdwg.mxu0
        %v437 = vmax.f32 %v432, 0.0
        %v438 = vld [vmem:[#allocation2] sm:$0xff]
        %v439 = vpack.c.bf16 %v437, %v437
        %v440 = vld [vmem:[#allocation8] sm:$0xf]
        %v441 = vld [vmem:[#allocation8 + $0x4] sm:$0xf]
        %v442 = vld [vmem:[#allocation8 + $0x8] sm:$0xf]
        %v443 = vld [vmem:[#allocation8 + $0xc] sm:$0xf]
        %v444 = vld [vmem:[#allocation8 + $0x10] sm:$0xf]
        %v445 = vld [vmem:[#allocation8 + $0x14] sm:$0xf]
        %v446 = vld [vmem:[#allocation8 + $0x18] sm:$0xf]
        %v447 = vld [vmem:[#allocation8 + $0x1c] sm:$0xf]
        %v448 = vld [vmem:[#allocation8 + $0x20] sm:$0xf]
        %v449 = vld [vmem:[#allocation8 + $0x24] sm:$0xf]
        %v450 = vld [vmem:[#allocation8 + $0x28] sm:$0xf]
        %v451 = vld [vmem:[#allocation8 + $0x2c] sm:$0xf]
        %v452 = vld [vmem:[#allocation8 + $0x30] sm:$0xf]
        %v453 = vld [vmem:[#allocation8 + $0x34] sm:$0xf]
        %v454 = vld [vmem:[#allocation8 + $0x38] sm:$0xf]
        %v455 = vld [vmem:[#allocation8 + $0x3c] sm:$0xf]
        %v472 = vunpack.c.l.b16 %v440
        %v473 = vunpack.c.l.b16 %v441
        %v474 = vunpack.c.l.b16 %v442
        %v475 = vunpack.c.l.b16 %v443
        %v476 = vunpack.c.l.b16 %v444
        %v477 = vunpack.c.l.b16 %v445
        %v478 = vunpack.c.l.b16 %v446
        %v479 = vunpack.c.l.b16 %v447
        %v480 = vunpack.c.l.b16 %v448
        %v481 = vunpack.c.l.b16 %v449
        %v482 = vunpack.c.l.b16 %v450
        %v483 = vunpack.c.l.b16 %v451
        %v484 = vunpack.c.l.b16 %v452
        %v485 = vunpack.c.l.b16 %v453
        %v486 = vunpack.c.l.b16 %v454
        %v487 = vunpack.c.l.b16 %v455
        %v488 = vpack.c.b16 %v473, %v472
        %v489 = vpack.c.b16 %v475, %v474
        %v490 = vpack.c.b16 %v477, %v476
        %v491 = vpack.c.b16 %v479, %v478
        %v492 = vpack.c.b16 %v481, %v480
        %v493 = vpack.c.b16 %v483, %v482
        %v494 = vpack.c.b16 %v485, %v484
        %v495 = vpack.c.b16 %v487, %v486
        %504 = vmatprep.subr.bf16.mxu0 0
        %505 = vmatpush1.bf16.msra.mxu0 %v488
        %506 = vmatprep.subr.bf16.mxu0 0
        %507 = vmatpush1.bf16.msra.mxu0 %v489
        %508 = vmatprep.subr.bf16.mxu0 0
        %509 = vmatpush1.bf16.msra.mxu0 %v490
        %510 = vmatprep.subr.bf16.mxu0 0
        %511 = vmatpush1.bf16.msra.mxu0 %v491
        %512 = vmatprep.subr.bf16.mxu0 0
        %513 = vmatpush1.bf16.msra.mxu0 %v492
        %514 = vmatprep.subr.bf16.mxu0 0
        %515 = vmatpush1.bf16.msra.mxu0 %v493
        %516 = vmatprep.subr.bf16.mxu0 0
        %517 = vmatpush1.bf16.msra.mxu0 %v494
        %518 = vmatprep.subr.bf16.mxu0 0
        %519 = vmatpush1.bf16.msra.mxu0 %v495
        %520 = vmatprep.subr.bf16.mxu0 0
        %521 = vmatpush1.bf16.msra.mxu0 0
        %522 = vmatprep.subr.bf16.mxu0 0
        %523 = vmatpush1.bf16.msra.mxu0 0
        %524 = vmatprep.subr.bf16.mxu0 0
        %525 = vmatpush1.bf16.msra.mxu0 0
        %526 = vmatprep.subr.bf16.mxu0 0
        %527 = vmatpush1.bf16.msra.mxu0 0
        %528 = vmatprep.subr.bf16.mxu0 0
        %529 = vmatpush1.bf16.msra.mxu0 0
        %530 = vmatprep.subr.bf16.mxu0 0
        %531 = vmatpush1.bf16.msra.mxu0 0
        %532 = vmatprep.subr.bf16.mxu0 0
        %533 = vmatpush1.bf16.msra.mxu0 0
        %534 = vmatprep.subr.bf16.mxu0 0
        %535 = vmatpush1.bf16.msra.mxu0 0
        %536 = vmatprep.mubr.bf16.mxu0 0
        %537 = vmatmul.mubr.bf16.gmra.mrb[0].mxu0 %v439
        %v538 = vpop.f32.mrb[0].mxu0
        %v539 = vadd.f32 0.0, %v538
        %v540 = vpop.f32.mrb[0].mxu0
        %v541 = vpop.f32.mrb[0].mxu0
        %v542 = vpop.f32.mrb[0].mxu0
        %543 = vdwg.mxu0
        %v544 = vadd.f32 %v438, %v539
        %545 = vst [vmem:[#allocation2] sm:$0xff] %v544
        // Predicated region
        $region57: #{tpu_custom_call.1} parent=39 // pred_check
          %p546 = pneg %p312
        $region58: #{tpu_custom_call.1} parent=39 // pred_check_branch
          %548 = sbr.rel (%p546) target = $region60
        $region59: #{tpu_custom_call.1} parent=39 // pred_region
          %v549 = vld [vmem:[#allocation2] sm:$0xff]
          %550 = vst [vmem:[%s306] sm:$0xff] %v549
        $region60: #{tpu_custom_call.1} parent=39 // pred_fallthru
          _
        %s551 = sand.u32 %s168, 1
        %s552 = scalar_lea.sflag [#allocation5], %s551
        %s553 = sand.u32 %s168, 1
        %s554 = smul.addr %s553, 8
        %s555 = scalar_lea.vmem [#allocation9], %s554
        // Predicated region
        $region61: #{tpu_custom_call.1} parent=39 // pred_check
          %p556 = pneg %p178
        $region62: #{tpu_custom_call.1} parent=39 // pred_check_branch
          %558 = sbr.rel (%p556) target = $region64
        $region63: #{tpu_custom_call.1} parent=39 // pred_region
          %s560 = ssub.s32 128, 128
          %561 = vsyncadd %s552, %s560
          %s562 = smul.addr %s27, 128
          %s563 = scalar_lea.hbm %s5, %s562
          %s565 = sshll.u32 %s555, 4
          %s566 = int_to_ptr.vmem [resolvable:$true] %s565
          %568 = dma.vmem_to_hbm [thread:$0]  %s566, 128, %s563, %s552
        $region64: #{tpu_custom_call.1} parent=39 // pred_fallthru
          _
      $region40: #{tpu_custom_call.1} parent=5 // pred_fallthru
        _
      %p569 = scmp.le.s32.totalorder 2, %s18
      // Predicated region
      $region65: #{tpu_custom_call.1} parent=5 // pred_check
        %p570 = pneg %p569
      $region66: #{tpu_custom_call.1} parent=5 // pred_check_branch
        %572 = sbr.rel (%p570) target = $region68
      $region67: #{tpu_custom_call.1} parent=5 // pred_region
        %s573 = ssub.s32 %s18, 2
        // Predicated region
        $region69: #{tpu_custom_call.1} parent=67 // pred_check
          %p574 = pneg %p184
        $region70: #{tpu_custom_call.1} parent=67 // pred_check_branch
          %576 = sbr.rel (%p574) target = $region72
        $region71: #{tpu_custom_call.1} parent=67 // pred_region
          %s577 = sand.u32 %s169, 1
          %s578 = scalar_lea.sflag [#allocation5], %s577
          %s579 = sand.u32 %s169, 1
          %s580 = smul.addr %s579, 8
          %s581 = scalar_lea.vmem [#allocation9], %s580
          %582 = dma.done %s578, 128
        $region72: #{tpu_custom_call.1} parent=67 // pred_fallthru
          _
      $region68: #{tpu_custom_call.1} parent=5 // pred_fallthru
        _
    $region6: #{tpu_custom_call.1} parent=1 // loop_footer
      %s22 = sadd.s32 1, %s18
    $region7: #{tpu_custom_call.1} parent=1 // loop_footer_branch
      %17 = sbr.rel target = $region3
    $region8: #{tpu_custom_call.1} parent=1 // loop_exit
      _
    %583 = vsyncpa [#allocation4], 1
    %s584 = scalar_lea.sflag [#allocation4], 1
    %585 = vsyncpa %s584, 1
    %586 = vsyncpa [#allocation7], 1
    %587 = vsyncpa [#allocation5], 1
    %s588 = scalar_lea.sflag [#allocation5], 1
    %589 = vsyncpa %s588, 1

</llo_original>
